<compile_context>
chip_gen: v5e
topology: v5e:2x2
jax: 0.10.0
libtpu: 0.0.40
codegen_flags: <defaults>
</compile_context>

<pallas_src>
import functools
import math

import jax
import jax.numpy as jnp
from jax.experimental import pallas as pl
from jax.experimental.pallas import tpu as pltpu


# ---------------------------------------------------------------------------
# Kernels
# ---------------------------------------------------------------------------

def _ln_kernel_bias(x_ref, w_ref, b_ref, o_ref, *, eps, inv_f):
    # x_ref block: (tR, F); w_ref/b_ref: (1, F) resident. eps/inv_f are Python
    # floats (compile-time literals), so nothing is captured as a constant.
    x = x_ref[...].astype(jnp.float32)
    s1 = jnp.sum(x, axis=-1, keepdims=True)
    s2 = jnp.sum(x * x, axis=-1, keepdims=True)
    mean = s1 * inv_f
    var = jnp.maximum(s2 * inv_f - mean * mean, 0.0)   # correction=0, clamped
    inv = jax.lax.rsqrt(var + eps)                     # EUP, essentially free
    y = (x - mean) * inv * w_ref[...] + b_ref[...]
    o_ref[...] = y.astype(o_ref.dtype)


def _ln_kernel_nobias(x_ref, w_ref, o_ref, *, eps, inv_f):
    x = x_ref[...].astype(jnp.float32)
    s1 = jnp.sum(x, axis=-1, keepdims=True)
    s2 = jnp.sum(x * x, axis=-1, keepdims=True)
    mean = s1 * inv_f
    var = jnp.maximum(s2 * inv_f - mean * mean, 0.0)
    inv = jax.lax.rsqrt(var + eps)
    y = (x - mean) * inv * w_ref[...]
    o_ref[...] = y.astype(o_ref.dtype)


# ---------------------------------------------------------------------------
# VMEM budgeting / tiling helpers
# ---------------------------------------------------------------------------

def _vmem_limit_bytes():
    """Generation-aware vmem_limit_bytes for this bandwidth-bound kernel."""
    cap = 0
    try:
        info = pltpu.get_tpu_info()
        cap = int(getattr(info, "vmem_capacity_bytes", 0) or 0)
    except Exception:
        cap = 0
    if cap >= 100 * 1024 * 1024:        # v5e / v6e: 128 MiB physical VMEM
        return 96 * 1024 * 1024
    if cap >= 48 * 1024 * 1024:         # v7x: 64 MiB per TensorCore
        return 40 * 1024 * 1024
    return 32 * 1024 * 1024             # unknown / interpret: conservative


def _per_element_charge(itemsize):
    # Double-buffered in + out tiles in the input dtype (4 * itemsize bytes
    # per element) plus headroom for ~3 tile-sized f32 intermediates that
    # Mosaic may materialize (casted x, x*x / centered x, y).
    return 4 * itemsize + 12


def _choose_row_tile(R, F, itemsize, limit_bytes):
    """Largest row tile whose VMEM footprint stays under ~75% of the limit.

    Block shape is (tR, F); tR is a multiple of 8 (sublane) or equals R.
    """
    if R <= 8:
        return R
    charge = _per_element_charge(itemsize)
    budget = (limit_bytes * 3) // 4
    max_rows = budget // (F * charge)
    max_rows = max(8, (int(max_rows) // 8) * 8)
    if R <= max_rows:
        return R
    # Prefer a divisor of R (no padded edge block) but ONLY if it is not much
    # smaller than max_rows; otherwise take max_rows and let Pallas mask the
    # padded edge block (rows are independent, so padding is safe).
    stop = max(max_rows // 2, 8) - 1
    for t in range(max_rows, stop, -8):
        if R % t == 0:
            return t
    return max_rows


# ---------------------------------------------------------------------------
# Pure-JAX reference / fallback (matches the PyTorch module)
# ---------------------------------------------------------------------------

def layernorm_ref(x, weight, bias=None, *, data_shape, eps=1e-5):
    nd = len(data_shape)
    agg = tuple(range(x.ndim - nd, x.ndim))
    xf = x.astype(jnp.float32)
    mean = jnp.mean(xf, axis=agg, keepdims=True)
    var = jnp.mean((xf - mean) ** 2, axis=agg, keepdims=True)
    y = (xf - mean) / jnp.sqrt(var + eps) * weight.astype(jnp.float32)
    if bias is not None:
        y = y + bias.astype(jnp.float32)
    return y.astype(x.dtype)


# ---------------------------------------------------------------------------
# Wrapper
# ---------------------------------------------------------------------------

def layernorm_pallas(x, weight, bias=None, *, data_shape, eps=1e-5):
    """Pallas LayerNorm. Normalizes x over its trailing len(data_shape) dims."""
    data_shape = tuple(int(d) for d in data_shape)
    nd = len(data_shape)
    assert tuple(x.shape[x.ndim - nd:]) == data_shape, "data_shape mismatch"

    lead = x.shape[: x.ndim - nd]
    R = int(math.prod(lead)) if lead else 1
    F = int(math.prod(data_shape))

    itemsize = jnp.dtype(x.dtype).itemsize
    limit = _vmem_limit_bytes()

    # Fall back to plain XLA when the Pallas path would be wasteful (F < 128:
    # lane-masked stores) or infeasible (even an 8-row block blows the VMEM
    # budget). Both cases are covered by TODOs at the top of the file.
    min_block_bytes = 8 * F * _per_element_charge(itemsize)
    if F < 128 or min_block_bytes > (limit * 3) // 4:
        return layernorm_ref(x, weight, bias, data_shape=data_shape, eps=eps)

    x2 = x.reshape(R, F)
    w2 = weight.reshape(1, F).astype(jnp.float32)
    has_bias = bias is not None
    if has_bias:
        b2 = bias.reshape(1, F).astype(jnp.float32)

    tR = _choose_row_tile(R, F, itemsize, limit)
    grid = (pl.cdiv(R, tR),)

    x_spec = pl.BlockSpec((tR, F), lambda r: (r, 0))
    p_spec = pl.BlockSpec((1, F), lambda r: (0, 0))     # weight/bias resident
    out_spec = pl.BlockSpec((tR, F), lambda r: (r, 0))

    if has_bias:
        kernel = functools.partial(_ln_kernel_bias,
                                   eps=float(eps), inv_f=1.0 / float(F))
        in_specs = [x_spec, p_spec, p_spec]
        operands = (x2, w2, b2)
    else:
        kernel = functools.partial(_ln_kernel_nobias,
                                   eps=float(eps), inv_f=1.0 / float(F))
        in_specs = [x_spec, p_spec]
        operands = (x2, w2)

    cost = pl.CostEstimate(
        flops=int(7 * R * F),
        transcendentals=int(R),                              # rsqrt per row
        bytes_accessed=int(2 * R * F * itemsize + (2 if has_bias else 1) * F * 4),
    )

    out2 = pl.pallas_call(
        kernel,
        out_shape=jax.ShapeDtypeStruct((R, F), x.dtype),
        grid_spec=pltpu.PrefetchScalarGridSpec(
            num_scalar_prefetch=0,
            grid=grid,
            in_specs=in_specs,
            out_specs=out_spec,
        ),
        compiler_params=pltpu.CompilerParams(
            dimension_semantics=("parallel",),
            vmem_limit_bytes=int(limit),
        ),
        cost_estimate=cost,
    )(*operands)

    return out2.reshape(x.shape)


# ---------------------------------------------------------------------------
# Demo / correctness check
# ---------------------------------------------------------------------------

if __name__ == "__main__":
    key = jax.random.PRNGKey(0)
    k1, k2, k3 = jax.random.split(key, 3)

    B, S, H = 2, 8, 128
    x = jax.random.normal(k1, (B, S, H), dtype=jnp.float32)
    w = 1.0 + 0.1 * jax.random.normal(k2, (H,), dtype=jnp.float32)
    b = 0.1 * jax.random.normal(k3, (H,), dtype=jnp.float32)

    atol = rtol = 2e-5

    # Case 1: data_shape=(H,), with bias (Pallas path, lane-dense F=128).
    out = layernorm_pallas(x, w, b, data_shape=(H,), eps=1e-5)
    jax.block_until_ready(out)
    ref = layernorm_ref(x, w, b, data_shape=(H,), eps=1e-5)
    assert out.shape == x.shape and out.dtype == x.dtype
    assert jnp.allclose(out, ref, atol=atol, rtol=rtol)

    # Case 2: no bias.
    out_nb = layernorm_pallas(x, w, None, data_shape=(H,), eps=1e-5)
    jax.block_until_ready(out_nb)
    ref_nb = layernorm_ref(x, w, None, data_shape=(H,), eps=1e-5)
    assert jnp.allclose(out_nb, ref_nb, atol=atol, rtol=rtol)

    # Case 3: multi-dim data_shape (normalize over last two dims, F = S*H).
    kw, kb = jax.random.split(k2)
    w2d = 1.0 + 0.1 * jax.random.normal(kw, (S, H), dtype=jnp.float32)
    b2d = 0.1 * jax.random.normal(kb, (S, H), dtype=jnp.float32)
    out2d = layernorm_pallas(x, w2d, b2d, data_shape=(S, H), eps=1e-5)
    jax.block_until_ready(out2d)
    ref2d = layernorm_ref(x, w2d, b2d, data_shape=(S, H), eps=1e-5)
    assert jnp.allclose(out2d, ref2d, atol=atol, rtol=rtol)

    # Case 4: small feature count (F < 128) -> XLA fallback path.
    Hs = 32
    xs = jax.random.normal(k1, (B, S, Hs), dtype=jnp.float32)
    ws = 1.0 + 0.1 * jax.random.normal(k2, (Hs,), dtype=jnp.float32)
    bs = 0.1 * jax.random.normal(k3, (Hs,), dtype=jnp.float32)
    outs = layernorm_pallas(xs, ws, bs, data_shape=(Hs,), eps=1e-5)
    jax.block_until_ready(outs)
    refs = layernorm_ref(xs, ws, bs, data_shape=(Hs,), eps=1e-5)
    assert jnp.allclose(outs, refs, atol=atol, rtol=rtol)

    print("KERNEL_OK")
</pallas_src>

<mosaic_0001>
module attributes {stable_mosaic.version = 11 : i64} {
  func.func @_ln_kernel_bias(%arg0: i32, %arg1: memref<16x128xf32, #tpu.memory_space<vmem>>, %arg2: memref<1x128xf32, #tpu.memory_space<vmem>>, %arg3: memref<1x128xf32, #tpu.memory_space<vmem>>, %arg4: memref<16x128xf32, #tpu.memory_space<vmem>>) attributes {dimension_semantics = [#tpu.dimension_semantics<parallel>], iteration_bounds = array<i64: 1>, scalar_prefetch = 0 : i64, scratch_operands = 0 : i64, tpu.core_type = #tpu.core_type<tc>, window_params = [{transform_indices = @transform_0, window_bounds = array<i64: 16, 128>}, {pipeline_mode = #tpu.pipeline_mode<synchronous>, transform_indices = @transform_1, window_bounds = array<i64: 1, 128>}, {pipeline_mode = #tpu.pipeline_mode<synchronous>, transform_indices = @transform_2, window_bounds = array<i64: 1, 128>}, {transform_indices = @transform_3, window_bounds = array<i64: 16, 128>}]} {
    %c0 = arith.constant 0 : index
    %c0_0 = arith.constant 0 : index
    %0 = vector.load %arg1[%c0, %c0_0] : memref<16x128xf32, #tpu.memory_space<vmem>>, vector<16x128xf32>
    %cst = arith.constant dense<0.000000e+00> : vector<16xf32>
    %1 = vector.multi_reduction <add>, %0, %cst [1] : vector<16x128xf32> to vector<16xf32>
    %2 = vector.shape_cast %1 : vector<16xf32> to vector<16x1xf32>
    %3 = arith.mulf %0, %0 : vector<16x128xf32>
    %cst_1 = arith.constant dense<0.000000e+00> : vector<16xf32>
    %4 = vector.multi_reduction <add>, %3, %cst_1 [1] : vector<16x128xf32> to vector<16xf32>
    %5 = vector.shape_cast %4 : vector<16xf32> to vector<16x1xf32>
    %cst_2 = arith.constant 7.812500e-03 : f32
    %6 = vector.broadcast %cst_2 : f32 to vector<16x1xf32>
    %7 = arith.mulf %2, %6 : vector<16x1xf32>
    %cst_3 = arith.constant 7.812500e-03 : f32
    %8 = vector.broadcast %cst_3 : f32 to vector<16x1xf32>
    %9 = arith.mulf %5, %8 : vector<16x1xf32>
    %10 = arith.mulf %7, %7 : vector<16x1xf32>
    %11 = arith.subf %9, %10 : vector<16x1xf32>
    %cst_4 = arith.constant 0.000000e+00 : f32
    %12 = vector.broadcast %cst_4 : f32 to vector<16x1xf32>
    %13 = arith.maximumf %11, %12 : vector<16x1xf32>
    %cst_5 = arith.constant 9.99999974E-6 : f32
    %14 = vector.broadcast %cst_5 : f32 to vector<16x1xf32>
    %15 = arith.addf %13, %14 : vector<16x1xf32>
    %16 = math.rsqrt %15 : vector<16x1xf32>
    %17 = vector.broadcast %7 : vector<16x1xf32> to vector<16x128xf32>
    %18 = arith.subf %0, %17 : vector<16x128xf32>
    %19 = vector.broadcast %16 : vector<16x1xf32> to vector<16x128xf32>
    %20 = arith.mulf %18, %19 : vector<16x128xf32>
    %c0_6 = arith.constant 0 : index
    %c0_7 = arith.constant 0 : index
    %21 = vector.load %arg2[%c0_6, %c0_7] : memref<1x128xf32, #tpu.memory_space<vmem>>, vector<1x128xf32>
    %22 = vector.broadcast %21 : vector<1x128xf32> to vector<16x128xf32>
    %23 = arith.mulf %20, %22 : vector<16x128xf32>
    %c0_8 = arith.constant 0 : index
    %c0_9 = arith.constant 0 : index
    %24 = vector.load %arg3[%c0_8, %c0_9] : memref<1x128xf32, #tpu.memory_space<vmem>>, vector<1x128xf32>
    %25 = vector.broadcast %24 : vector<1x128xf32> to vector<16x128xf32>
    %26 = arith.addf %23, %25 : vector<16x128xf32>
    %c0_10 = arith.constant 0 : index
    %c0_11 = arith.constant 0 : index
    %27 = vector.load %arg4[%c0_10, %c0_11] : memref<16x128xf32, #tpu.memory_space<vmem>>, vector<16x128xf32>
    tpu.vector_store %arg4[%c0_10, %c0_11], %26 {strides = array<i32>} : memref<16x128xf32, #tpu.memory_space<vmem>>, vector<16x128xf32>,
    return
  }
  func.func @transform_0(%arg0: i32) -> (i32, i32) {
    %c0_i32 = arith.constant 0 : i32
    %c0_i32_0 = arith.constant 0 : i32
    return %arg0, %c0_i32 : i32, i32
  }
  func.func @transform_1(%arg0: i32) -> (i32, i32) {
    %c0_i32 = arith.constant 0 : i32
    %c0_i32_0 = arith.constant 0 : i32
    %c0_i32_1 = arith.constant 0 : i32
    return %c0_i32, %c0_i32_0 : i32, i32
  }
  func.func @transform_2(%arg0: i32) -> (i32, i32) {
    %c0_i32 = arith.constant 0 : i32
    %c0_i32_0 = arith.constant 0 : i32
    %c0_i32_1 = arith.constant 0 : i32
    return %c0_i32, %c0_i32_0 : i32, i32
  }
  func.func @transform_3(%arg0: i32) -> (i32, i32) {
    %c0_i32 = arith.constant 0 : i32
    %c0_i32_0 = arith.constant 0 : i32
    return %arg0, %c0_i32 : i32, i32
  }
}

</mosaic_0001>

<llo_original>
// kernel: tpu_custom_call.1
$region0: #{tpu_custom_call.1}
  #allocation0 [shape = 'u32[]', space=smem, size = 0x4, offset = 0x4, fixed_abs, tag = 'smem constant byte address 0x4 - core index']
  #allocation1 [shape = 'u32[72,128]{1,0:T(1,128)}', space=vmem, size = 0x9000, scoped, tag = 'internal scratch']
  %s0 = inlined_call_operand.hbm [shape: f32[16,128], index: 0, kind: input, shape index: {}]
  %s1 = inlined_call_operand.hbm [shape: f32[1,128], index: 1, kind: input, shape index: {}]
  %s2 = inlined_call_operand.vmem [shape: f32[1,128], index: 2, kind: input, shape index: {}]
  %s3 = inlined_call_operand.hbm [shape: f32[16,128], index: 3, kind: output, shape index: {}]
  %s4 = sld [smem:[#allocation0]]
  $region30: #{tpu_custom_call.1} parent=0
    _
  %s6 = ssub.s32 1, %s4
  %s7 = scalar_select 0, %s6, %s4
  $region1: #{tpu_custom_call.1} parent=0
    #allocation2 [shape = 'u8[8192]{0}', space=vmem, size = 0x2000, scoped, tag = 'input window, operand 0, single buffered']
    #allocation3 [shape = 's32[1]{0}', space=sflag, size = 0x4, scoped, tag = 'scoped memory for tpu_custom_call.1']
    #allocation4 [shape = 's32[1]{0}', space=sflag, size = 0x4, scoped, tag = 'scoped memory for tpu_custom_call.1']
    #allocation5 [shape = 'u8[512]{0}', space=vmem, size = 0x400, scoped, tag = 'input window, operand 1, single buffered']
    #allocation6 [shape = 's32[1]{0}', space=sflag, size = 0x4, scoped, tag = 'scoped memory for tpu_custom_call.1']
    #allocation7 [shape = 'u8[8192]{0}', space=vmem, size = 0x2000, scoped, tag = 'output window, operand 0, single buffered']
    %8 = vsyncpa [#allocation3], 0
    %9 = vsyncpa [#allocation6], 0
    %10 = vsyncpa [#allocation4], 0
    // Predicated region
    $region2: #{tpu_custom_call.1} parent=1 // pred_check
      _
    $region3: #{tpu_custom_call.1} parent=1 // pred_check_branch
      %12 = sbr.rel (0) target = $region5
    $region4: #{tpu_custom_call.1} parent=1 // pred_region
      %14 = vsyncadd [#allocation3], 0
      %s15 = sshll.u32 %s0, 4
      %s16 = int_to_ptr.hbm [resolvable:$true] %s15
      %s17 = sshll.u32 [#allocation2], 4
      %s18 = int_to_ptr.vmem [resolvable:$true] %s17
      %23 = dma.hbm_to_vmem [thread:$0]  %s16, 256, %s18, [#allocation3], 128, 128, 8
    $region5: #{tpu_custom_call.1} parent=1 // pred_fallthru
      _
    // Predicated region
    $region6: #{tpu_custom_call.1} parent=1 // pred_check
      _
    $region7: #{tpu_custom_call.1} parent=1 // pred_check_branch
      %25 = sbr.rel (0) target = $region9
    $region8: #{tpu_custom_call.1} parent=1 // pred_region
      %27 = vsyncadd [#allocation6], 0
      %s29 = sshll.u32 %s1, 4
      %s30 = int_to_ptr.hbm [resolvable:$true] %s29
      %s31 = sshll.u32 [#allocation5], 4
      %s32 = int_to_ptr.vmem [resolvable:$true] %s31
      %34 = dma.hbm_to_vmem [thread:$0]  %s30, 16, %s32, [#allocation6]
    $region9: #{tpu_custom_call.1} parent=1 // pred_fallthru
      _
    // Predicated region
    $region10: #{tpu_custom_call.1} parent=1 // pred_check
      _
    $region11: #{tpu_custom_call.1} parent=1 // pred_check_branch
      %36 = sbr.rel (0) target = $region13
    $region12: #{tpu_custom_call.1} parent=1 // pred_region
      _
    $region13: #{tpu_custom_call.1} parent=1 // pred_fallthru
      _
    // Predicated region
    $region14: #{tpu_custom_call.1} parent=1 // pred_check
      _
    $region15: #{tpu_custom_call.1} parent=1 // pred_check_branch
      %38 = sbr.rel (0) target = $region17
    $region16: #{tpu_custom_call.1} parent=1 // pred_region
      %40 = dma.done [#allocation3], 256
    $region17: #{tpu_custom_call.1} parent=1 // pred_fallthru
      _
    // Predicated region
    $region18: #{tpu_custom_call.1} parent=1 // pred_check
      _
    $region19: #{tpu_custom_call.1} parent=1 // pred_check_branch
      %42 = sbr.rel (0) target = $region21
    $region20: #{tpu_custom_call.1} parent=1 // pred_region
      %44 = dma.done [#allocation6], 16
    $region21: #{tpu_custom_call.1} parent=1 // pred_fallthru
      _
    %v45 = vld [vmem:[#allocation2] sm:$0xff]
    %v46 = vld [vmem:[#allocation2 + $0x8] sm:$0xff]
    %47 = vadd.xlane.f32.xlu0 %v45
    %v48 = vpop.xlane.xlu0 %47
    %49 = vadd.xlane.f32.xlu0 %v46
    %v50 = vpop.xlane.xlu0 %49
    %v51 = vmul.f32 %v45, %v45
    %v52 = vmul.f32 %v46, %v46
    %53 = vadd.xlane.f32.xlu0 %v51
    %v54 = vpop.xlane.xlu0 %53
    %55 = vadd.xlane.f32.xlu0 %v52
    %v56 = vpop.xlane.xlu0 %55
    %v57 = vmul.f32 %v48, 0.0078125
    %v58 = vmul.f32 %v50, 0.0078125
    %v59 = vmul.f32 %v54, 0.0078125
    %v60 = vmul.f32 %v56, 0.0078125
    %v61 = vmul.f32 %v57, %v57
    %v62 = vmul.f32 %v58, %v58
    %v63 = vsub.f32 %v59, %v61
    %v64 = vsub.f32 %v60, %v62
    %v65 = vmax.f32 %v63, 0.0
    %v66 = vmax.f32 %v64, 0.0
    %v67 = vadd.f32 %v65, 1e-05
    %v68 = vadd.f32 %v66, 1e-05
    %v69 = vrsqrt.pop %v67
    %v70 = vmul.f32 %v69, %v67
    %v71 = vmul.f32 %v70, %v69
    %v72 = vmul.f32 0.5, %v71
    %v73 = vsub.f32 1.5, %v72
    %v74 = vmul.f32 %v69, %v73
    %vm75 = vweird.f32 %v67
    %vm76 = vweird.f32 %v69
    %vm77 = vmor %vm75, %vm76
    %v78 = vsel %vm77, %v69, %v74
    %v79 = vrsqrt.pop %v68
    %v80 = vmul.f32 %v79, %v68
    %v81 = vmul.f32 %v80, %v79
    %v82 = vmul.f32 0.5, %v81
    %v83 = vsub.f32 1.5, %v82
    %v84 = vmul.f32 %v79, %v83
    %vm85 = vweird.f32 %v68
    %vm86 = vweird.f32 %v79
    %vm87 = vmor %vm85, %vm86
    %v88 = vsel %vm87, %v79, %v84
    %v89 = vsub.f32 %v45, %v57
    %v90 = vsub.f32 %v46, %v58
    %v91 = vmul.f32 %v89, %v78
    %v92 = vmul.f32 %v90, %v88
    %v93 = vld [vmem:[#allocation5] sm:$0x1]
    %v95 = vperm.slane %v93, 0
    %v97 = vmul.f32 %v91, %v95
    %v98 = vmul.f32 %v92, %v95
    %v99 = vld [vmem:[%s2] sm:$0x1]
    %v101 = vperm.slane %v99, 0
    %v103 = vadd.f32 %v97, %v101
    %v104 = vadd.f32 %v98, %v101
    %105 = vst [vmem:[#allocation7] sm:$0xff] %v103
    %106 = vst [vmem:[#allocation7 + $0x8] sm:$0xff] %v104
    // Predicated region
    $region22: #{tpu_custom_call.1} parent=1 // pred_check
      _
    $region23: #{tpu_custom_call.1} parent=1 // pred_check_branch
      %108 = sbr.rel (0) target = $region25
    $region24: #{tpu_custom_call.1} parent=1 // pred_region
      %110 = vsyncadd [#allocation4], 0
      %s111 = sshll.u32 [#allocation7], 4
      %s112 = int_to_ptr.vmem [resolvable:$true] %s111
      %s113 = sshll.u32 %s3, 4
      %s114 = int_to_ptr.hbm [resolvable:$true] %s113
      %119 = dma.vmem_to_hbm [thread:$0]  %s112, 256, %s114, [#allocation4], 128, 128, 8
    $region25: #{tpu_custom_call.1} parent=1 // pred_fallthru
      _
    // Predicated region
    $region26: #{tpu_custom_call.1} parent=1 // pred_check
      _
    $region27: #{tpu_custom_call.1} parent=1 // pred_check_branch
      %121 = sbr.rel (0) target = $region29
    $region28: #{tpu_custom_call.1} parent=1 // pred_region
      %123 = dma.done [#allocation4], 256
    $region29: #{tpu_custom_call.1} parent=1 // pred_fallthru
      _
    %124 = vsyncpa [#allocation3], 1
    %125 = vsyncpa [#allocation6], 1
    %126 = vsyncpa [#allocation4], 1

</llo_original>
